<compile_context>
chip_gen: v6e
topology: v6e:2x2x1
jax: 0.10.0
libtpu: 0.0.40
codegen_flags: <defaults>
</compile_context>

<pallas_src>
import functools

import jax
import jax.numpy as jnp
from jax.experimental import pallas as pl
from jax.experimental.pallas import tpu as pltpu


def _round_up(x: int, m: int) -> int:
    return ((x + m - 1) // m) * m


def _partial_sums_kernel(pred_ref, true_ref, out_ref, *, cols, tm, chunk,
                         grid_rows, tail_rows):
    """Per-block per-lane partial sums of (t - p)^2 and t^2."""
    i = pl.program_id(0)

    # The last block may extend past the end of the array; Pallas leaves that
    # region of the VMEM tile unspecified.  Zero-fill it (zeros contribute
    # nothing to either squared norm) instead of masking every element.
    if tail_rows:
        @pl.when(i == grid_rows - 1)
        def _():
            valid = tm - tail_rows
            true_ref[pl.ds(valid, tail_rows), :] = jnp.zeros(
                (tail_rows, cols), dtype=true_ref.dtype)
            pred_ref[pl.ds(valid, tail_rows), :] = jnp.zeros(
                (tail_rows, cols), dtype=pred_ref.dtype)

    def chunk_sums(r, size):
        t = true_ref[pl.ds(r, size), :].astype(jnp.float32)
        p = pred_ref[pl.ds(r, size), :].astype(jnp.float32)
        d = t - p
        return (jnp.sum(d * d, axis=0, keepdims=True),
                jnp.sum(t * t, axis=0, keepdims=True))

    nfull = tm // chunk
    rem = tm - nfull * chunk
    dd = jnp.zeros((1, cols), jnp.float32)
    tt = jnp.zeros((1, cols), jnp.float32)

    if nfull > 0:
        def body(s, carry):
            a, b = carry
            r = pl.multiple_of(s * chunk, chunk)
            cd, ct = chunk_sums(r, chunk)
            return a + cd, b + ct
        dd, tt = jax.lax.fori_loop(0, nfull, body, (dd, tt),
                                   unroll=min(2, nfull))
    if rem > 0:
        cd, ct = chunk_sums(nfull * chunk, rem)
        dd, tt = dd + cd, tt + ct

    # Single (2, cols) store (no per-sublane masked stores).
    out_ref[...] = jnp.concatenate([dd, tt], axis=0)[None]


def spectral_convergence_loss(y_pred: jax.Array, y_true: jax.Array,
                              *, lanes: int = 512,
                              target_block_bytes: int = 4 << 20) -> jax.Array:
    """Pallas implementation of SpectralConvergenceLoss.forward."""
    assert y_pred.shape == y_true.shape, "y_pred / y_true must share a shape"
    assert y_pred.dtype == y_true.dtype, "y_pred / y_true must share a dtype"
    n = y_pred.size
    assert n > 0, "empty input"

    itemsize = jnp.dtype(y_true.dtype).itemsize
    sub = 8 * max(1, 4 // itemsize)          # sublane granularity per dtype

    # Copy-free 2-D view of both inputs (row-major reshape => bitcast in HLO).
    if n % lanes == 0:
        rows, cols = n // lanes, lanes       # perfectly lane-dense
    else:
        shp = y_pred.shape if y_pred.ndim >= 2 else (1, n)
        cols = shp[-1]
        rows = n // cols
    p2 = y_pred.reshape(rows, cols)
    t2 = y_true.reshape(rows, cols)

    lanes_pad = _round_up(cols, 128)
    row_bytes = lanes_pad * itemsize
    # TODO(synk): add column blocking for pathologically wide trailing dims.
    assert sub * row_bytes <= (16 << 20), "trailing dim too wide for row-only blocking"

    # Inner chunk: ~16 f32 vregs per operand so elementwise + sublane reduce
    # stays in vregs (no VMEM-materialized f32 temporaries).
    chunk = (16 * 8 * 128) // lanes_pad
    chunk = max(sub, min(256, (chunk // sub) * sub))
    chunk = min(chunk, _round_up(rows, sub))

    # Row-block per grid step: ~target_block_bytes per input, but keep >= 4
    # grid steps for medium inputs so both v7x TensorCores get work.
    rows_target = max(chunk, (target_block_bytes // row_bytes) // chunk * chunk)
    steps = -(-rows // rows_target)
    if rows >= 4 * chunk:
        steps = max(steps, 4)
    tm = _round_up(-(-rows // steps), chunk)
    if tm >= rows:
        tm, grid_rows = rows, 1              # one full-extent block, no tail
    else:
        grid_rows = -(-rows // tm)
    tail_rows = grid_rows * tm - rows        # unspecified rows in last block

    # 2 inputs x 2 pipeline buffers x block, plus slack.  Fits all of
    # v5e/v6e (128 MiB) and v7x (64 MiB physical / 32 MiB scoped).
    block_vmem = tm * lanes_pad * itemsize
    vmem_limit = int(min(48 << 20, max(16 << 20, 4 * block_vmem + (2 << 20))))

    kernel = functools.partial(
        _partial_sums_kernel, cols=cols, tm=tm, chunk=chunk,
        grid_rows=grid_rows, tail_rows=tail_rows)

    partials = pl.pallas_call(
        kernel,
        out_shape=jax.ShapeDtypeStruct((grid_rows, 2, cols), jnp.float32),
        grid_spec=pltpu.PrefetchScalarGridSpec(
            num_scalar_prefetch=0,
            grid=(grid_rows,),
            in_specs=[
                pl.BlockSpec((tm, cols), lambda i: (i, 0)),
                pl.BlockSpec((tm, cols), lambda i: (i, 0)),
            ],
            out_specs=pl.BlockSpec((1, 2, cols), lambda i: (i, 0, 0)),
        ),
        compiler_params=pltpu.CompilerParams(
            dimension_semantics=("parallel",),   # independent partial sums
            vmem_limit_bytes=vmem_limit,
        ),
    )(p2, t2)

    dd = jnp.sum(partials[:, 0, :], dtype=jnp.float32)  # ||y_true - y_pred||_F^2
    tt = jnp.sum(partials[:, 1, :], dtype=jnp.float32)  # ||y_true||_F^2
    # Matches torch.norm(...)/torch.norm(...) (no eps guard, like the reference).
    return jnp.sqrt(dd) / jnp.sqrt(tt)


def _reference(y_pred, y_true):
    d = y_true.astype(jnp.float32) - y_pred.astype(jnp.float32)
    return jnp.sqrt(jnp.sum(d * d)) / jnp.sqrt(
        jnp.sum(y_true.astype(jnp.float32) ** 2))


if __name__ == "__main__":
    key = jax.random.PRNGKey(0)
    loss_fn = jax.jit(spectral_convergence_loss)

    cases = [
        ((2, 16, 128), jnp.float32),   # lane-aligned: flat (8, 512) bitcast view
        ((2, 33, 100), jnp.float32),   # ragged STFT shape: single full-extent block
        ((3, 257, 100), jnp.float32),  # ragged + multi-step grid + zero-filled tail block
        ((2, 33, 100), jnp.bfloat16),  # in-kernel upcast path
    ]
    for idx, (shape, dt) in enumerate(cases):
        k1, k2 = jax.random.split(jax.random.fold_in(key, idx))
        y_true = jnp.abs(jax.random.normal(k1, shape)).astype(dt)
        y_pred = jnp.abs(jax.random.normal(k2, shape)).astype(dt)

        loss = loss_fn(y_pred, y_true)
        jax.block_until_ready(loss)

        ref = _reference(y_pred, y_true)
        assert jnp.allclose(loss, ref, rtol=1e-5, atol=1e-6), (shape, dt, loss, ref)

    print("KERNEL_OK")
</pallas_src>

<mosaic_0001>
module attributes {stable_mosaic.version = 11 : i64} {
  func.func @_partial_sums_kernel(%arg0: i32, %arg1: memref<8x512xf32, #tpu.memory_space<vmem>>, %arg2: memref<8x512xf32, #tpu.memory_space<vmem>>, %arg3: memref<1x2x512xf32, #tpu.memory_space<vmem>>) attributes {dimension_semantics = [#tpu.dimension_semantics<parallel>], iteration_bounds = array<i64: 1>, scalar_prefetch = 0 : i64, scratch_operands = 0 : i64, tpu.core_type = #tpu.core_type<tc>, window_params = [{transform_indices = @transform_0, window_bounds = array<i64: 8, 512>}, {transform_indices = @transform_1, window_bounds = array<i64: 8, 512>}, {transform_indices = @transform_2, window_bounds = array<i64: 1, 2, 512>}]} {
    %cst = arith.constant 0.000000e+00 : f32
    %0 = vector.broadcast %cst : f32 to vector<1x512xf32>
    %cst_0 = arith.constant 0.000000e+00 : f32
    %1 = vector.broadcast %cst_0 : f32 to vector<1x512xf32>
    %c0_i32 = arith.constant 0 : i32
    %c8_i32 = arith.constant 8 : i32
    %2 = arith.muli %c0_i32, %c8_i32 : i32
    %3 = tpu.assume_multiple %2, 8 : i32
    %4 = arith.index_cast %3 : i32 to index
    %c0 = arith.constant 0 : index
    %5 = vector.load %arg2[%4, %c0] : memref<8x512xf32, #tpu.memory_space<vmem>>, vector<8x512xf32>
    %6 = arith.index_cast %3 : i32 to index
    %c0_1 = arith.constant 0 : index
    %7 = vector.load %arg1[%6, %c0_1] : memref<8x512xf32, #tpu.memory_space<vmem>>, vector<8x512xf32>
    %8 = arith.subf %5, %7 : vector<8x512xf32>
    %9 = arith.mulf %8, %8 : vector<8x512xf32>
    %cst_2 = arith.constant dense<0.000000e+00> : vector<512xf32>
    %10 = vector.multi_reduction <add>, %9, %cst_2 [0] : vector<8x512xf32> to vector<512xf32>
    %11 = vector.shape_cast %10 : vector<512xf32> to vector<1x512xf32>
    %12 = arith.mulf %5, %5 : vector<8x512xf32>
    %cst_3 = arith.constant dense<0.000000e+00> : vector<512xf32>
    %13 = vector.multi_reduction <add>, %12, %cst_3 [0] : vector<8x512xf32> to vector<512xf32>
    %14 = vector.shape_cast %13 : vector<512xf32> to vector<1x512xf32>
    %15 = arith.addf %0, %11 : vector<1x512xf32>
    %16 = arith.addf %1, %14 : vector<1x512xf32>
    %c1_i32 = arith.constant 1 : i32
    %17 = tpu.concatenate %15, %16 in 0 : vector<1x512xf32>, vector<1x512xf32> -> vector<2x512xf32>
    %18 = vector.shape_cast %17 : vector<2x512xf32> to vector<1x2x512xf32>
    %c0_4 = arith.constant 0 : index
    %c0_5 = arith.constant 0 : index
    %c0_6 = arith.constant 0 : index
    %19 = vector.load %arg3[%c0_4, %c0_5, %c0_6] : memref<1x2x512xf32, #tpu.memory_space<vmem>>, vector<1x2x512xf32>
    tpu.vector_store %arg3[%c0_4, %c0_5, %c0_6], %18 {strides = array<i32>} : memref<1x2x512xf32, #tpu.memory_space<vmem>>, vector<1x2x512xf32>,
    return
  }
  func.func @transform_0(%arg0: i32) -> (i32, i32) {
    %c0_i32 = arith.constant 0 : i32
    %c0_i32_0 = arith.constant 0 : i32
    return %arg0, %c0_i32 : i32, i32
  }
  func.func @transform_1(%arg0: i32) -> (i32, i32) {
    %c0_i32 = arith.constant 0 : i32
    %c0_i32_0 = arith.constant 0 : i32
    return %arg0, %c0_i32 : i32, i32
  }
  func.func @transform_2(%arg0: i32) -> (i32, i32, i32) {
    %c0_i32 = arith.constant 0 : i32
    %c0_i32_0 = arith.constant 0 : i32
    %c0_i32_1 = arith.constant 0 : i32
    return %arg0, %c0_i32, %c0_i32_0 : i32, i32, i32
  }
}

</mosaic_0001>

<llo_original>
// kernel: spectral_convergence_loss.1
$region0: #{spectral_convergence_loss.1}
  #allocation0 [shape = 'u32[]', space=smem, size = 0x4, offset = 0x4, fixed_abs, tag = 'smem constant byte address 0x4 - core index']
  #allocation1 [shape = 'u32[144,128]{1,0:T(1,128)}', space=vmem, size = 0x12000, scoped, tag = 'internal scratch']
  %s0 = inlined_call_operand.vmem [shape: f32[8,512], index: 0, kind: input, shape index: {}]
  %s1 = inlined_call_operand.vmem [shape: f32[8,512], index: 1, kind: input, shape index: {}]
  %s2 = inlined_call_operand.vmem [shape: f32[1,2,512], index: 2, kind: output, shape index: {}]
  %s3 = sld [smem:[#allocation0]]
  $region18: #{spectral_convergence_loss.1} parent=0
    _
  %s5 = ssub.s32 1, %s3
  %s6 = scalar_select 0, %s5, %s3
  // Predicated region
  $region2: #{spectral_convergence_loss.1} parent=0 // pred_check
    _
  $region3: #{spectral_convergence_loss.1} parent=0 // pred_check_branch
    %8 = sbr.rel (0) target = $region5
  $region4: #{spectral_convergence_loss.1} parent=0 // pred_region
    _
  $region5: #{spectral_convergence_loss.1} parent=0 // pred_fallthru
    _
  // Predicated region
  $region6: #{spectral_convergence_loss.1} parent=0 // pred_check
    _
  $region7: #{spectral_convergence_loss.1} parent=0 // pred_check_branch
    %10 = sbr.rel (0) target = $region9
  $region8: #{spectral_convergence_loss.1} parent=0 // pred_region
    _
  $region9: #{spectral_convergence_loss.1} parent=0 // pred_fallthru
    _
  %s11 = smul.u32 0, 4
  %s12 = smul.addr %s11, 8
  %s13 = scalar_lea.vmem %s1, %s12
  %v14 = vld [vmem:[%s13] sm:$0xff]
  %v15 = vld [vmem:[%s13 + $0x8] sm:$0xff]
  %v16 = vld [vmem:[%s13 + $0x10] sm:$0xff]
  %v17 = vld [vmem:[%s13 + $0x18] sm:$0xff]
  %s18 = smul.addr %s11, 8
  %s19 = scalar_lea.vmem %s0, %s18
  %v20 = vld [vmem:[%s19] sm:$0xff]
  %v21 = vld [vmem:[%s19 + $0x8] sm:$0xff]
  %v22 = vld [vmem:[%s19 + $0x10] sm:$0xff]
  %v23 = vld [vmem:[%s19 + $0x18] sm:$0xff]
  %v24 = vsub.f32 %v14, %v20
  %v25 = vsub.f32 %v15, %v21
  %v26 = vsub.f32 %v16, %v22
  %v27 = vsub.f32 %v17, %v23
  %v28 = vmul.f32 %v24, %v24
  %v29 = vmul.f32 %v25, %v25
  %v30 = vmul.f32 %v26, %v26
  %v31 = vmul.f32 %v27, %v27
  %v32 = vrot.slane %v28, 4
  %v33 = vadd.f32 %v28, %v32
  %v34 = vrot.slane %v33, 2
  %v35 = vadd.f32 %v33, %v34
  %v36 = vrot.slane %v35, 1
  %v37 = vadd.f32 %v35, %v36
  %v38 = vrot.slane %v29, 4
  %v39 = vadd.f32 %v29, %v38
  %v40 = vrot.slane %v39, 2
  %v41 = vadd.f32 %v39, %v40
  %v42 = vrot.slane %v41, 1
  %v43 = vadd.f32 %v41, %v42
  %v44 = vrot.slane %v30, 4
  %v45 = vadd.f32 %v30, %v44
  %v46 = vrot.slane %v45, 2
  %v47 = vadd.f32 %v45, %v46
  %v48 = vrot.slane %v47, 1
  %v49 = vadd.f32 %v47, %v48
  %v50 = vrot.slane %v31, 4
  %v51 = vadd.f32 %v31, %v50
  %v52 = vrot.slane %v51, 2
  %v53 = vadd.f32 %v51, %v52
  %v54 = vrot.slane %v53, 1
  %v55 = vadd.f32 %v53, %v54
  %v56 = vmul.f32 %v14, %v14
  %v57 = vmul.f32 %v15, %v15
  %v58 = vmul.f32 %v16, %v16
  %v59 = vmul.f32 %v17, %v17
  %v60 = vrot.slane %v56, 4
  %v61 = vadd.f32 %v56, %v60
  %v62 = vrot.slane %v61, 2
  %v63 = vadd.f32 %v61, %v62
  %v64 = vrot.slane %v63, 1
  %v65 = vadd.f32 %v63, %v64
  %v66 = vrot.slane %v57, 4
  %v67 = vadd.f32 %v57, %v66
  %v68 = vrot.slane %v67, 2
  %v69 = vadd.f32 %v67, %v68
  %v70 = vrot.slane %v69, 1
  %v71 = vadd.f32 %v69, %v70
  %v72 = vrot.slane %v58, 4
  %v73 = vadd.f32 %v58, %v72
  %v74 = vrot.slane %v73, 2
  %v75 = vadd.f32 %v73, %v74
  %v76 = vrot.slane %v75, 1
  %v77 = vadd.f32 %v75, %v76
  %v78 = vrot.slane %v59, 4
  %v79 = vadd.f32 %v59, %v78
  %v80 = vrot.slane %v79, 2
  %v81 = vadd.f32 %v79, %v80
  %v82 = vrot.slane %v81, 1
  %v83 = vadd.f32 %v81, %v82
  %v84 = vadd.f32 %v37, 0.0
  %v85 = vadd.f32 %v43, 0.0
  %v86 = vadd.f32 %v49, 0.0
  %v87 = vadd.f32 %v55, 0.0
  %v88 = vadd.f32 %v65, 0.0
  %v89 = vadd.f32 %v71, 0.0
  %v90 = vadd.f32 %v77, 0.0
  %v91 = vadd.f32 %v83, 0.0
  %vm92 = vcmask 1040384
  %v93 = vsel %vm92, %v84, %v88
  %v94 = vsel %vm92, %v85, %v89
  %v95 = vsel %vm92, %v86, %v90
  %v96 = vsel %vm92, %v87, %v91
  %v101 = vcombine.low %v93, %v94
  %v102 = vcombine.low %v95, %v96
  %v104 = vunpack.c.l.s4 1983009808
  %v105 = vunpack.c.0.s8 %v104
  %v106 = vlaneseq
  %v107 = vshrl.u32 %v106, 7
  %v108 = vsub.s32 %v105, %v107
  %v109 = vrot.slane %v101, %v108
  %v111 = vunpack.c.l.s4 1983009808
  %v112 = vunpack.c.0.s8 %v111
  %v113 = vlaneseq
  %v114 = vshrl.u32 %v113, 7
  %v115 = vsub.s32 %v112, %v114
  %v116 = vrot.slane %v102, %v115
  %v117 = vcombine.low %v109, %v116
  %119 = vst [vmem:[%s2] sm:$0xff] %v117
  // Predicated region
  $region10: #{spectral_convergence_loss.1} parent=0 // pred_check
    _
  $region11: #{spectral_convergence_loss.1} parent=0 // pred_check_branch
    %121 = sbr.rel (0) target = $region13
  $region12: #{spectral_convergence_loss.1} parent=0 // pred_region
    _
  $region13: #{spectral_convergence_loss.1} parent=0 // pred_fallthru
    _
  // Predicated region
  $region14: #{spectral_convergence_loss.1} parent=0 // pred_check
    _
  $region15: #{spectral_convergence_loss.1} parent=0 // pred_check_branch
    %123 = sbr.rel (0) target = $region17
  $region16: #{spectral_convergence_loss.1} parent=0 // pred_region
    _
  $region17: #{spectral_convergence_loss.1} parent=0 // pred_fallthru
    _

</llo_original>
